<compile_context>
chip_gen: v6e
topology: v6e:2x2x1
jax: 0.10.0
libtpu: 0.0.40
codegen_flags: <defaults>
</compile_context>

<pallas_src>
import functools

import jax
import jax.numpy as jnp
from jax.experimental import pallas as pl
from jax.experimental.pallas import tpu as pltpu


def _critic_kernel(x_ref, p_ref, o_ref, *, D, H1, H2, off_w2, off_small):
    """One batch tile of the critic MLP.

    Shapes seen by the kernel (TB = batch tile):
      x_ref : (TB, D)  f32 or bf16  input states (batch on sublanes)
      p_ref : (R, C)   f32          packed parameters (VMEM-resident):
                rows [0, H1)                 cols [0, D)  : w1   (out, in)
                rows [off_w2, off_w2+H2)     cols [0, H1) : w2   (out, in)
                rows [off_small, ...)        col 0        : b1
                                             col 1        : b2
                                             col 2        : w3 (as a column)
                row  off_small               col 3        : b3
      o_ref : (1, TB)  f32          lane-dense value row for this batch tile
    """
    # Upcast x in VMEM (free VPU work if the producer delivered bf16); all math f32.
    x = x_ref[...].astype(jnp.float32)                          # (TB, D)

    w1 = p_ref[0:H1, 0:D]                                       # (H1, D)
    w2 = p_ref[off_w2:off_w2 + H2, 0:H1]                        # (H2, H1)
    b1 = p_ref[off_small:off_small + H1, 0:1]                   # (H1, 1)
    b2 = p_ref[off_small:off_small + H2, 1:2]                   # (H2, 1)
    w3 = p_ref[off_small:off_small + H2, 2:3]                   # (H2, 1)
    b3 = p_ref[off_small:off_small + 1, 3:4]                    # (1, 1)

    # h1[h, b] = sum_d w1[h, d] * x[b, d]  -> batch lands on the lane axis.
    h1 = jax.lax.dot_general(
        w1, x,
        dimension_numbers=(((1,), (1,)), ((), ())),
        preferred_element_type=jnp.float32)                     # (H1, TB)
    h1 = jnp.maximum(h1 + b1, 0.0)

    h2 = jnp.dot(w2, h1, preferred_element_type=jnp.float32)    # (H2, TB)
    h2 = jnp.maximum(h2 + b2, 0.0)

    # Final H2 -> 1 layer: VPU multiply + sublane (XLU) reduction, lane-dense result.
    v = jnp.sum(h2 * w3, axis=0, keepdims=True) + b3            # (1, TB)
    o_ref[...] = v.astype(o_ref.dtype)


def _round_up(n, m):
    return ((n + m - 1) // m) * m


def _vmem_capacity_bytes():
    """Trace-time VMEM capacity; conservative 64 MiB (v7x per-core) fallback."""
    try:
        info = pltpu.get_tpu_info()
        for attr in ("vmem_capacity_bytes", "vmem_bytes", "vmem_size_bytes"):
            v = getattr(info, attr, None)
            if v:
                return int(v)
    except Exception:
        pass
    return 64 * 1024 * 1024


def _choose_tb(B, D, x_itemsize, block_b, vmem_budget_bytes):
    """Largest 256-multiple batch tile fitting the VMEM budget; prefer >=2 steps."""
    lane_d = _round_up(D, 128)
    # Per batch row: double-buffered lane-padded x block + double-buffered (1,TB) f32 out.
    bytes_per_row = 2 * lane_d * x_itemsize + 2 * 8 * 4
    tb = max(256, (vmem_budget_bytes // bytes_per_row) // 256 * 256)
    tb = min(tb, _round_up(max(block_b, 256), 256))
    b_full = _round_up(B, 256)
    tb = min(tb, b_full)
    # Prefer >= 2 grid steps so both of v7x's TensorCores get work.
    if b_full > 256 and b_full <= tb:
        tb = _round_up(b_full // 2, 256)
    return tb


@functools.partial(jax.jit, static_argnames=("block_b",))
def critic_forward(x, w1, b1, w2, b2, w3, b3, block_b=32768):
    """value = critic(x); x: (B, D) f32 or bf16, weights in PyTorch (out, in) layout."""
    B, D = x.shape
    H1 = w1.shape[0]
    H2 = w2.shape[0]

    # ---- Pack every parameter into one small f32 array (single resident DMA). ----
    H1p, H2p = _round_up(H1, 8), _round_up(H2, 8)
    off_w2 = H1p
    off_small = H1p + H2p
    Sp = _round_up(max(H1, H2, 1), 8)
    R = off_small + Sp
    C = max(D, H1, 4)
    params = jnp.zeros((R, C), jnp.float32)
    params = params.at[0:H1, 0:D].set(w1.astype(jnp.float32))
    params = params.at[off_w2:off_w2 + H2, 0:H1].set(w2.astype(jnp.float32))
    params = params.at[off_small:off_small + H1, 0].set(b1.reshape(H1).astype(jnp.float32))
    params = params.at[off_small:off_small + H2, 1].set(b2.reshape(H2).astype(jnp.float32))
    params = params.at[off_small:off_small + H2, 2].set(w3.reshape(H2).astype(jnp.float32))
    params = params.at[off_small, 3].set(b3.reshape(()).astype(jnp.float32))

    # ---- Generation-aware batch tile + explicit VMEM limit. ----
    vmem_cap = _vmem_capacity_bytes()
    TB = _choose_tb(B, D, x.dtype.itemsize, block_b, int(0.45 * vmem_cap))
    B_pad = _round_up(B, TB)
    x_pad = jnp.pad(x, ((0, B_pad - B), (0, 0))) if B_pad != B else x

    lane_d = _round_up(D, 128)
    est_vmem = (TB * (2 * lane_d * x.dtype.itemsize + 2 * 8 * 4)
                + 2 * _round_up(R, 8) * _round_up(C, 128) * 4
                + (2 << 20))
    vmem_limit = int(min(0.9 * vmem_cap, max(1.3 * est_vmem, 32 * 1024 * 1024)))

    grid = (B_pad // TB,)
    flops = 2 * B_pad * (D * H1 + H1 * H2 + H2)
    bytes_accessed = (x_pad.size * x_pad.dtype.itemsize
                      + params.size * 4
                      + B_pad * 4)

    kernel = functools.partial(_critic_kernel, D=D, H1=H1, H2=H2,
                               off_w2=off_w2, off_small=off_small)

    out = pl.pallas_call(
        kernel,
        out_shape=jax.ShapeDtypeStruct((1, B_pad), jnp.float32),
        grid_spec=pltpu.PrefetchScalarGridSpec(
            num_scalar_prefetch=0,
            grid=grid,
            in_specs=[
                pl.BlockSpec((TB, D), lambda i: (i, 0)),   # x: tiled over batch
                pl.BlockSpec((R, C), lambda i: (0, 0)),    # packed params: resident
            ],
            out_specs=pl.BlockSpec((1, TB), lambda i: (0, i)),  # lane-dense values
        ),
        compiler_params=pltpu.CompilerParams(
            dimension_semantics=("parallel",),
            vmem_limit_bytes=vmem_limit),
        cost_estimate=pl.CostEstimate(
            flops=flops, transcendentals=0, bytes_accessed=bytes_accessed),
    )(x_pad, params)

    # Padded rows (x = 0) carry relu(b1)-derived garbage; slice them off here.
    # Layout plumbing back to the PyTorch output shape (B, 1).
    return out[0, :B].reshape(B, 1)


def init_critic_params(key, input_dim, layers):
    """PyTorch nn.Linear-style init: U(+/- 1/sqrt(fan_in)), weights as (out, in)."""
    dims = [input_dim, layers[0], layers[1], 1]
    params = []
    for i in range(3):
        fan_in, fan_out = dims[i], dims[i + 1]
        key, kw, kb = jax.random.split(key, 3)
        bound = 1.0 / (fan_in ** 0.5)
        w = jax.random.uniform(kw, (fan_out, fan_in), jnp.float32, -bound, bound)
        b = jax.random.uniform(kb, (fan_out,), jnp.float32, -bound, bound)
        params += [w, b]
    return params


def critic_reference_f32(x, w1, b1, w2, b2, w3, b3):
    """Pure-JAX f32 reference of the PyTorch module semantics."""
    h1 = jnp.maximum(x @ w1.T + b1, 0.0)
    h2 = jnp.maximum(h1 @ w2.T + b2, 0.0)
    return h2 @ w3.T + b3


if __name__ == "__main__":
    # Shapes implied by the module: input_dims=(obs_dim,), layers=[h1, h2].
    # Batch deliberately not a multiple of the tile to exercise padding and a
    # multi-step (parallel) grid.
    batch = 300
    obs_dim = 16
    layers = [32, 32]

    key = jax.random.PRNGKey(0)
    key, kx = jax.random.split(key)
    x = jax.random.normal(kx, (batch, obs_dim), jnp.float32)

    w1, b1, w2, b2, w3, b3 = init_critic_params(key, obs_dim, layers)

    # f32 path (matches the PyTorch module dtype).
    value = critic_forward(x, w1, b1, w2, b2, w3, b3)
    value = jax.block_until_ready(value)
    assert value.shape == (batch, 1)

    ref_f32 = critic_reference_f32(x, w1, b1, w2, b2, w3, b3)
    assert jnp.allclose(value, ref_f32, atol=2e-2, rtol=2e-2)

    # bf16-x fast path (caller-side contract: no wrapper cast; kernel upcasts in VMEM,
    # weights stay f32). Compare against the f32 reference at the truncated input.
    x_bf16 = x.astype(jnp.bfloat16)
    value_bf16 = jax.block_until_ready(critic_forward(x_bf16, w1, b1, w2, b2, w3, b3))
    ref_bf16_in = critic_reference_f32(x_bf16.astype(jnp.float32), w1, b1, w2, b2, w3, b3)
    assert jnp.allclose(value_bf16, ref_bf16_in, atol=2e-2, rtol=2e-2)

    print("KERNEL_OK")
</pallas_src>

<mosaic_0001>
module attributes {stable_mosaic.version = 11 : i64} {
  func.func @_critic_kernel(%arg0: i32, %arg1: memref<256x16xf32, #tpu.memory_space<vmem>>, %arg2: memref<96x32xf32, #tpu.memory_space<vmem>>, %arg3: memref<1x256xf32, #tpu.memory_space<vmem>>) attributes {dimension_semantics = [#tpu.dimension_semantics<parallel>], iteration_bounds = array<i64: 2>, scalar_prefetch = 0 : i64, scratch_operands = 0 : i64, tpu.core_type = #tpu.core_type<tc>, window_params = [{transform_indices = @transform_0, window_bounds = array<i64: 256, 16>}, {pipeline_mode = #tpu.pipeline_mode<synchronous>, transform_indices = @transform_1, window_bounds = array<i64: 96, 32>}, {transform_indices = @transform_2, window_bounds = array<i64: 1, 256>}]} {
    %c0 = arith.constant 0 : index
    %c0_0 = arith.constant 0 : index
    %0 = vector.load %arg1[%c0, %c0_0] : memref<256x16xf32, #tpu.memory_space<vmem>>, vector<256x16xf32>
    %c0_1 = arith.constant 0 : index
    %c0_2 = arith.constant 0 : index
    %1 = vector.load %arg2[%c0_1, %c0_2] : memref<96x32xf32, #tpu.memory_space<vmem>>, vector<32x16xf32>
    %c32 = arith.constant 32 : index
    %c0_3 = arith.constant 0 : index
    %2 = vector.load %arg2[%c32, %c0_3] : memref<96x32xf32, #tpu.memory_space<vmem>>, vector<32x32xf32>
    %c64 = arith.constant 64 : index
    %c0_4 = arith.constant 0 : index
    %3 = vector.load %arg2[%c64, %c0_4] : memref<96x32xf32, #tpu.memory_space<vmem>>, vector<32x1xf32>
    %c64_5 = arith.constant 64 : index
    %c1 = arith.constant 1 : index
    %4 = vector.load %arg2[%c64_5, %c1] : memref<96x32xf32, #tpu.memory_space<vmem>>, vector<32x1xf32>
    %c64_6 = arith.constant 64 : index
    %c2 = arith.constant 2 : index
    %5 = vector.load %arg2[%c64_6, %c2] : memref<96x32xf32, #tpu.memory_space<vmem>>, vector<32x1xf32>
    %c64_7 = arith.constant 64 : index
    %c3 = arith.constant 3 : index
    %6 = vector.load %arg2[%c64_7, %c3] : memref<96x32xf32, #tpu.memory_space<vmem>>, vector<1x1xf32>
    %cst = arith.constant dense<0.000000e+00> : vector<32x256xf32>
    %7 = tpu.matmul %1, %0, %cst {dimension_numbers = #tpu.dot_dimension_numbers<[1], [1], [0], [0], [0, 0, 1, 0], [], []>} : vector<32x16xf32>, vector<256x16xf32>, vector<32x256xf32> -> vector<32x256xf32>
    %8 = vector.broadcast %3 : vector<32x1xf32> to vector<32x256xf32>
    %9 = arith.addf %7, %8 : vector<32x256xf32>
    %cst_8 = arith.constant 0.000000e+00 : f32
    %10 = vector.broadcast %cst_8 : f32 to vector<32x256xf32>
    %11 = arith.maximumf %9, %10 : vector<32x256xf32>
    %cst_9 = arith.constant dense<0.000000e+00> : vector<32x256xf32>
    %12 = tpu.matmul %2, %11, %cst_9 {dimension_numbers = #tpu.dot_dimension_numbers<[1], [0], [0], [1], [0, 0, 1, 1], [], []>} : vector<32x32xf32>, vector<32x256xf32>, vector<32x256xf32> -> vector<32x256xf32>
    %13 = vector.broadcast %4 : vector<32x1xf32> to vector<32x256xf32>
    %14 = arith.addf %12, %13 : vector<32x256xf32>
    %cst_10 = arith.constant 0.000000e+00 : f32
    %15 = vector.broadcast %cst_10 : f32 to vector<32x256xf32>
    %16 = arith.maximumf %14, %15 : vector<32x256xf32>
    %17 = vector.broadcast %5 : vector<32x1xf32> to vector<32x256xf32>
    %18 = arith.mulf %16, %17 : vector<32x256xf32>
    %cst_11 = arith.constant dense<0.000000e+00> : vector<256xf32>
    %19 = vector.multi_reduction <add>, %18, %cst_11 [0] : vector<32x256xf32> to vector<256xf32>
    %20 = vector.shape_cast %19 : vector<256xf32> to vector<1x256xf32>
    %21 = vector.broadcast %6 : vector<1x1xf32> to vector<1x256xf32>
    %22 = arith.addf %20, %21 : vector<1x256xf32>
    %c0_12 = arith.constant 0 : index
    %c0_13 = arith.constant 0 : index
    %23 = vector.load %arg3[%c0_12, %c0_13] : memref<1x256xf32, #tpu.memory_space<vmem>>, vector<1x256xf32>
    tpu.vector_store %arg3[%c0_12, %c0_13], %22 {strides = array<i32>} : memref<1x256xf32, #tpu.memory_space<vmem>>, vector<1x256xf32>,
    return
  }
  func.func @transform_0(%arg0: i32) -> (i32, i32) {
    %c0_i32 = arith.constant 0 : i32
    %c0_i32_0 = arith.constant 0 : i32
    return %arg0, %c0_i32 : i32, i32
  }
  func.func @transform_1(%arg0: i32) -> (i32, i32) {
    %c0_i32 = arith.constant 0 : i32
    %c0_i32_0 = arith.constant 0 : i32
    %c0_i32_1 = arith.constant 0 : i32
    return %c0_i32, %c0_i32_0 : i32, i32
  }
  func.func @transform_2(%arg0: i32) -> (i32, i32) {
    %c0_i32 = arith.constant 0 : i32
    %c0_i32_0 = arith.constant 0 : i32
    return %c0_i32, %arg0 : i32, i32
  }
}

</mosaic_0001>

<llo_original>
// kernel: critic_forward.1
$region0: #{critic_forward.1}
  #allocation0 [shape = 'u32[]', space=smem, size = 0x4, offset = 0x4, fixed_abs, tag = 'smem constant byte address 0x4 - core index']
  #allocation1 [shape = 'u32[144,128]{1,0:T(1,128)}', space=vmem, size = 0x12000, scoped, tag = 'internal scratch']
  %s0 = inlined_call_operand.vmem [shape: f32[512,16], index: 0, kind: input, shape index: {}]
  %s1 = inlined_call_operand.vmem [shape: f32[96,32], index: 1, kind: input, shape index: {}]
  %s2 = inlined_call_operand.vmem [shape: f32[1,512], index: 2, kind: output, shape index: {}]
  %s3 = sld [smem:[#allocation0]]
  $region41: #{critic_forward.1} parent=0
    _
  %s5 = ssub.s32 1, %s3
  %s6 = scalar_select 0, %s5, %s3
  loop: start=0, step=1, limit=4
  $region2: #{critic_forward.1} parent=0 // loop_pre_header
    _
  $region3: #{critic_forward.1} parent=0 // loop_header
    %s8 = sphi 0, %s12
    %p9 = scmp.ge.s32.totalorder %s8, 4
    %s18 = sphi 0, %s20
    %s21 = sphi 0, %s18
    %s22 = sphi 0, %s21
    %s38 = sphi 0, %s22
    %s42 = sphi 0, %s42
    %s44 = sphi 0, %s42
    %s45 = sphi 0, %s44
    %s59 = sphi 0, %s45
    %s65 = sphi 0, %s67
    %s68 = sphi 0, %s65
    %s69 = sphi 0, %s68
    %s85 = sphi 0, %s69
  $region4: #{critic_forward.1} parent=0 // loop_header_branch
    %11 = sbr.rel (%p9) target = $region8
  $region5: #{critic_forward.1} parent=0 // loop_body
    %s13 = ssub.s32 %s8, 1
    %s14 = ssub.s32 %s8, 2
    %s15 = sadd.s32 %s8, 1
    %s16 = ssub.s32 %s8, %s15
    %p17 = scmp.eq.s32.totalorder %s16, 0
    %s19 = sadd.s32 %s18, 1
    %s20 = scalar_select %p17, %s18, %s19
    %p23 = pneg %p17
    %p24 = scmp.eq.s32.totalorder %s8, 1
    %p25 = por %p23, %p24
    %p26 = scmp.ne.s32.totalorder %s18, %s21
    %p27 = scmp.eq.s32.totalorder %s8, 0
    %p28 = por %p26, %p27
    %p29 = scmp.ne.s32.totalorder %s18, %s21
    %p30 = scmp.eq.s32.totalorder %s13, 1
    %p31 = por %p29, %p30
    %p32 = scmp.ne.s32.totalorder %s21, %s22
    %p33 = scmp.eq.s32.totalorder %s13, 0
    %p34 = por %p32, %p33
    %p35 = scmp.ne.s32.totalorder %s21, %s22
    %p36 = scmp.eq.s32.totalorder %s14, 1
    %p37 = por %p35, %p36
    %p39 = scmp.ne.s32.totalorder %s22, %s38
    %p40 = scmp.eq.s32.totalorder %s14, 0
    %p41 = por %p39, %p40
    %s43 = sadd.s32 %s42, 1
    %p46 = scmp.eq.s32.totalorder %s8, 1
    %p47 = scmp.ne.s32.totalorder %s42, %s44
    %p48 = scmp.eq.s32.totalorder %s8, 0
    %p49 = por %p47, %p48
    %p50 = scmp.ne.s32.totalorder %s42, %s44
    %p51 = scmp.eq.s32.totalorder %s13, 1
    %p52 = por %p50, %p51
    %p53 = scmp.ne.s32.totalorder %s44, %s45
    %p54 = scmp.eq.s32.totalorder %s13, 0
    %p55 = por %p53, %p54
    %p56 = scmp.ne.s32.totalorder %s44, %s45
    %p57 = scmp.eq.s32.totalorder %s14, 1
    %p58 = por %p56, %p57
    %p60 = scmp.ne.s32.totalorder %s45, %s59
    %p61 = scmp.eq.s32.totalorder %s14, 0
    %p62 = por %p60, %p61
    %s63 = ssub.s32 %s8, %s15
    %p64 = scmp.eq.s32.totalorder %s63, 0
    %s66 = sadd.s32 %s65, 1
    %s67 = scalar_select %p64, %s65, %s66
    %p70 = pneg %p64
    %p71 = scmp.eq.s32.totalorder %s8, 1
    %p72 = por %p70, %p71
    %p73 = scmp.ne.s32.totalorder %s65, %s68
    %p74 = scmp.eq.s32.totalorder %s8, 0
    %p75 = por %p73, %p74
    %p76 = scmp.ne.s32.totalorder %s65, %s68
    %p77 = scmp.eq.s32.totalorder %s13, 1
    %p78 = por %p76, %p77
    %p79 = scmp.ne.s32.totalorder %s68, %s69
    %p80 = scmp.eq.s32.totalorder %s13, 0
    %p81 = por %p79, %p80
    %p82 = scmp.ne.s32.totalorder %s68, %s69
    %p83 = scmp.eq.s32.totalorder %s14, 1
    %p84 = por %p82, %p83
    %p86 = scmp.ne.s32.totalorder %s69, %s85
    %p87 = scmp.eq.s32.totalorder %s14, 0
    %p88 = por %p86, %p87
    %p89 = scmp.le.s32.totalorder 1, %s8
    %p90 = scmp.lt.s32.totalorder %s8, 3
    %p91 = pnand %p89, %p90
    %p92 = pneg %p91
    // Predicated region
    $region9: #{critic_forward.1} parent=5 // pred_check
      _
    $region10: #{critic_forward.1} parent=5 // pred_check_branch
      %94 = sbr.rel (%p91) target = $region12
    $region11: #{critic_forward.1} parent=5 // pred_region
      %s95 = ssub.s32 %s8, 1
      // Predicated region
      $region13: #{critic_forward.1} parent=11 // pred_check
        %p96 = pneg %p55
      $region14: #{critic_forward.1} parent=11 // pred_check_branch
        %98 = sbr.rel (%p96) target = $region16
      $region15: #{critic_forward.1} parent=11 // pred_region
        _
      $region16: #{critic_forward.1} parent=11 // pred_fallthru
        _
    $region12: #{critic_forward.1} parent=5 // pred_fallthru
      _
    %p99 = scmp.lt.s32.totalorder %s8, 2
    // Predicated region
    $region17: #{critic_forward.1} parent=5 // pred_check
      %p100 = pneg %p99
    $region18: #{critic_forward.1} parent=5 // pred_check_branch
      %102 = sbr.rel (%p100) target = $region20
    $region19: #{critic_forward.1} parent=5 // pred_region
      // Predicated region
      $region21: #{critic_forward.1} parent=19 // pred_check
        %p103 = pneg %p28
      $region22: #{critic_forward.1} parent=19 // pred_check_branch
        %105 = sbr.rel (%p103) target = $region24
      $region23: #{critic_forward.1} parent=19 // pred_region
        %s106 = smul.u32 32, %s8
        %p107 = scmp.lt.s32.totalorder %s106, 63
        %s108 = scalar_select %p107, %s106, 63
        %s109 = smul.addr %s108, 8
        %s110 = scalar_lea.vmem %s0, %s109
        %s111 = smul.u32 32, %s8
      $region24: #{critic_forward.1} parent=19 // pred_fallthru
        _
    $region20: #{critic_forward.1} parent=5 // pred_fallthru
      _
    %p112 = scmp.le.s32.totalorder 1, %s8
    %p113 = scmp.lt.s32.totalorder %s8, 3
    %p114 = pnand %p112, %p113
    %p115 = pneg %p114
    // Predicated region
    $region25: #{critic_forward.1} parent=5 // pred_check
      _
    $region26: #{critic_forward.1} parent=5 // pred_check_branch
      %117 = sbr.rel (%p114) target = $region28
    $region27: #{critic_forward.1} parent=5 // pred_region
      %s118 = ssub.s32 %s8, 1
      %s119 = smul.u32 32, %s13
      %p120 = scmp.lt.s32.totalorder %s119, 63
      %s121 = scalar_select %p120, %s119, 63
      %s122 = smul.addr %s121, 8
      %s123 = scalar_lea.vmem %s0, %s122
      %p124 = pneg %p34
      %p125 = pneg %p31
      %p126 = pneg %p55
      %p127 = pneg %p52
      %p128 = pneg %p81
      %p129 = pneg %p78
      %s130 = smul.u32 2, %s13
      %p131 = scmp.lt.s32.totalorder %s130, 3
      %s132 = scalar_select %p131, %s130, 3
      %s133 = scalar_lea.vmem %s2, %s132
      %s134 = smul.u32 32, %s13
      %p135 = scmp.lt.s32.totalorder %s134, 63
      %s136 = scalar_select %p135, %s134, 63
      %s137 = smul.addr %s136, 8
      %s138 = scalar_lea.vmem %s0, %s137
      %s139 = smul.u32 32, %s13
      %s140 = smul.u32 2, %s13
      %p141 = scmp.lt.s32.totalorder %s140, 3
      %s142 = scalar_select %p141, %s140, 3
      %s143 = scalar_lea.vmem %s2, %s142
      %s144 = smul.u32 2, %s13
      %v145 = vld [vmem:[%s138] sm:$0xff]
      %v146 = vld [vmem:[%s138 + $0x8] sm:$0xff]
      %v147 = vld [vmem:[%s138 + $0x10] sm:$0xff]
      %v148 = vld [vmem:[%s138 + $0x18] sm:$0xff]
      %v149 = vld [vmem:[%s138 + $0x20] sm:$0xff]
      %v150 = vld [vmem:[%s138 + $0x28] sm:$0xff]
      %v151 = vld [vmem:[%s138 + $0x30] sm:$0xff]
      %v152 = vld [vmem:[%s138 + $0x38] sm:$0xff]
      %v153 = vld [vmem:[%s138 + $0x40] sm:$0xff]
      %v154 = vld [vmem:[%s138 + $0x48] sm:$0xff]
      %v155 = vld [vmem:[%s138 + $0x50] sm:$0xff]
      %v156 = vld [vmem:[%s138 + $0x58] sm:$0xff]
      %v157 = vld [vmem:[%s138 + $0x60] sm:$0xff]
      %v158 = vld [vmem:[%s138 + $0x68] sm:$0xff]
      %v159 = vld [vmem:[%s138 + $0x70] sm:$0xff]
      %v160 = vld [vmem:[%s138 + $0x78] sm:$0xff]
      %v161 = vld [vmem:[%s138 + $0x80] sm:$0xff]
      %v162 = vld [vmem:[%s138 + $0x88] sm:$0xff]
      %v163 = vld [vmem:[%s138 + $0x90] sm:$0xff]
      %v164 = vld [vmem:[%s138 + $0x98] sm:$0xff]
      %v165 = vld [vmem:[%s138 + $0xa0] sm:$0xff]
      %v166 = vld [vmem:[%s138 + $0xa8] sm:$0xff]
      %v167 = vld [vmem:[%s138 + $0xb0] sm:$0xff]
      %v168 = vld [vmem:[%s138 + $0xb8] sm:$0xff]
      %v169 = vld [vmem:[%s138 + $0xc0] sm:$0xff]
      %v170 = vld [vmem:[%s138 + $0xc8] sm:$0xff]
      %v171 = vld [vmem:[%s138 + $0xd0] sm:$0xff]
      %v172 = vld [vmem:[%s138 + $0xd8] sm:$0xff]
      %v173 = vld [vmem:[%s138 + $0xe0] sm:$0xff]
      %v174 = vld [vmem:[%s138 + $0xe8] sm:$0xff]
      %v175 = vld [vmem:[%s138 + $0xf0] sm:$0xff]
      %v176 = vld [vmem:[%s138 + $0xf8] sm:$0xff]
      %v177 = vld [vmem:[%s1] sm:$0xff]
      %v178 = vld [vmem:[%s1 + $0x8] sm:$0xff]
      %v179 = vld [vmem:[%s1 + $0x10] sm:$0xff]
      %v180 = vld [vmem:[%s1 + $0x18] sm:$0xff]
      %v181 = vld [vmem:[%s1 + $0x20] sm:$0xff]
      %v182 = vld [vmem:[%s1 + $0x28] sm:$0xff]
      %v183 = vld [vmem:[%s1 + $0x30] sm:$0xff]
      %v184 = vld [vmem:[%s1 + $0x38] sm:$0xff]
      %v185 = vld [vmem:[%s1 + $0x40] sm:$0xff]
      %v186 = vld [vmem:[%s1 + $0x48] sm:$0xff]
      %v187 = vld [vmem:[%s1 + $0x50] sm:$0xff]
      %v188 = vld [vmem:[%s1 + $0x58] sm:$0xff]
      %v189 = vld [vmem:[%s1 + $0x40] sm:$0x1]
      %191 = vset.pattern.permute.xlu0 0
      %192 = vperm.xlu0 %191, %v185
      %v193 = vpop.permute.xlu0 %192
      %196 = vset.pattern.permute.xlu0 0
      %197 = vperm.xlu0 %196, %v186
      %v198 = vpop.permute.xlu0 %197
      %201 = vset.pattern.permute.xlu0 0
      %202 = vperm.xlu0 %201, %v187
      %v203 = vpop.permute.xlu0 %202
      %206 = vset.pattern.permute.xlu0 0
      %207 = vperm.xlu0 %206, %v188
      %v208 = vpop.permute.xlu0 %207
      %vm210 = vcmask 130048
      %v212 = vsel %vm210, %v177, 0
      %v215 = vsel %vm210, %v178, 0
      %v218 = vsel %vm210, %v179, 0
      %v221 = vsel %vm210, %v180, 0
      %v224 = vsel %vm210, %v145, 0
      %v227 = vsel %vm210, %v146, 0
      %v230 = vsel %vm210, %v147, 0
      %v233 = vsel %vm210, %v148, 0
      %v236 = vsel %vm210, %v149, 0
      %v239 = vsel %vm210, %v150, 0
      %v242 = vsel %vm210, %v151, 0
      %v245 = vsel %vm210, %v152, 0
      %v248 = vsel %vm210, %v153, 0
      %v251 = vsel %vm210, %v154, 0
      %v254 = vsel %vm210, %v155, 0
      %v257 = vsel %vm210, %v156, 0
      %v260 = vsel %vm210, %v157, 0
      %v263 = vsel %vm210, %v158, 0
      %v266 = vsel %vm210, %v159, 0
      %v269 = vsel %vm210, %v160, 0
      %v272 = vsel %vm210, %v161, 0
      %v275 = vsel %vm210, %v162, 0
      %v278 = vsel %vm210, %v163, 0
      %v281 = vsel %vm210, %v164, 0
      %v284 = vsel %vm210, %v165, 0
      %v287 = vsel %vm210, %v166, 0
      %v290 = vsel %vm210, %v167, 0
      %v293 = vsel %vm210, %v168, 0
      %v296 = vsel %vm210, %v169, 0
      %v299 = vsel %vm210, %v170, 0
      %v302 = vsel %vm210, %v171, 0
      %v305 = vsel %vm210, %v172, 0
      %v308 = vsel %vm210, %v173, 0
      %v311 = vsel %vm210, %v174, 0
      %v314 = vsel %vm210, %v175, 0
      %v317 = vsel %vm210, %v176, 0
      %319 = vmatprep.subr.mxu0 0.0
      %320 = vmatpush1.xpose.msra.mxu0 %v269
      %321 = vmatprep.subr.mxu0 0.0
      %322 = vmatpush1.xpose.msra.mxu0 %v266
      %323 = vmatprep.subr.mxu0 0.0
      %324 = vmatpush1.xpose.msra.mxu0 %v263
      %325 = vmatprep.subr.mxu0 0.0
      %326 = vmatpush1.xpose.msra.mxu0 %v260
      %327 = vmatprep.subr.mxu0 0.0
      %328 = vmatpush1.xpose.msra.mxu0 %v257
      %329 = vmatprep.subr.mxu0 0.0
      %330 = vmatpush1.xpose.msra.mxu0 %v254
      %331 = vmatprep.subr.mxu0 0.0
      %332 = vmatpush1.xpose.msra.mxu0 %v251
      %333 = vmatprep.subr.mxu0 0.0
      %334 = vmatpush1.xpose.msra.mxu0 %v248
      %335 = vmatprep.subr.mxu0 0.0
      %336 = vmatpush1.xpose.msra.mxu0 %v245
      %337 = vmatprep.subr.mxu0 0.0
      %338 = vmatpush1.xpose.msra.mxu0 %v242
      %339 = vmatprep.subr.mxu0 0.0
      %340 = vmatpush1.xpose.msra.mxu0 %v239
      %341 = vmatprep.subr.mxu0 0.0
      %342 = vmatpush1.xpose.msra.mxu0 %v236
      %343 = vmatprep.subr.mxu0 0.0
      %344 = vmatpush1.xpose.msra.mxu0 %v233
      %345 = vmatprep.subr.mxu0 0.0
      %346 = vmatpush1.xpose.msra.mxu0 %v230
      %347 = vmatprep.subr.mxu0 0.0
      %348 = vmatpush1.xpose.msra.mxu0 %v227
      %349 = vmatprep.subr.mxu0 0.0
      %350 = vmatpush1.xpose.msra.mxu0 %v224
      %351 = vmatprep.subr.mxu0 0.0
      %352 = vmatpush2.xpose.msra.mxu0 %v317
      %353 = vmatprep.subr.mxu0 0.0
      %354 = vmatpush2.xpose.msra.mxu0 %v314
      %355 = vmatprep.subr.mxu0 0.0
      %356 = vmatpush2.xpose.msra.mxu0 %v311
      %357 = vmatprep.subr.mxu0 0.0
      %358 = vmatpush2.xpose.msra.mxu0 %v308
      %359 = vmatprep.subr.mxu0 0.0
      %360 = vmatpush2.xpose.msra.mxu0 %v305
      %361 = vmatprep.subr.mxu0 0.0
      %362 = vmatpush2.xpose.msra.mxu0 %v302
      %363 = vmatprep.subr.mxu0 0.0
      %364 = vmatpush2.xpose.msra.mxu0 %v299
      %365 = vmatprep.subr.mxu0 0.0
      %366 = vmatpush2.xpose.msra.mxu0 %v296
      %367 = vmatprep.subr.mxu0 0.0
      %368 = vmatpush2.xpose.msra.mxu0 %v293
      %369 = vmatprep.subr.mxu0 0.0
      %370 = vmatpush2.xpose.msra.mxu0 %v290
      %371 = vmatprep.subr.mxu0 0.0
      %372 = vmatpush2.xpose.msra.mxu0 %v287
      %373 = vmatprep.subr.mxu0 0.0
      %374 = vmatpush2.xpose.msra.mxu0 %v284
      %375 = vmatprep.subr.mxu0 0.0
      %376 = vmatpush2.xpose.msra.mxu0 %v281
      %377 = vmatprep.subr.mxu0 0.0
      %378 = vmatpush2.xpose.msra.mxu0 %v278
      %379 = vmatprep.subr.mxu0 0.0
      %380 = vmatpush2.xpose.msra.mxu0 %v275
      %381 = vmatprep.subr.mxu0 0.0
      %382 = vmatpush2.xpose.msra.mxu0 %v272
      %383 = vmatprep.mubr.f32.mxu0 0.0
      %384 = vmatmul.mubr.f32.gmra.mxu0 %v212
      %v385 = vpop.f32.mrf.mxu0
      %v386 = vadd.f32 %v193, %v385
      %v387 = vpop.f32.mrf.mxu0
      %v388 = vadd.f32 %v193, %v387
      %389 = vmatprep.mubr.f32.mxu0 0.0
      %390 = vmatmul.mubr.f32.gmra.mxu0 %v215
      %v391 = vpop.f32.mrf.mxu0
      %v392 = vadd.f32 %v198, %v391
      %v393 = vpop.f32.mrf.mxu0
      %v394 = vadd.f32 %v198, %v393
      %395 = vmatprep.mubr.f32.mxu0 0.0
      %396 = vmatmul.mubr.f32.gmra.mxu0 %v218
      %v397 = vpop.f32.mrf.mxu0
      %v398 = vadd.f32 %v203, %v397
      %v399 = vpop.f32.mrf.mxu0
      %v400 = vadd.f32 %v203, %v399
      %401 = vmatprep.mubr.f32.mxu0 0.0
      %402 = vmatmul.mubr.f32.gmra.mxu0 %v221
      %v403 = vpop.f32.mrf.mxu0
      %v404 = vadd.f32 %v208, %v403
      %v405 = vpop.f32.mrf.mxu0
      %v406 = vadd.f32 %v208, %v405
      %407 = vdwg.mxu0
      %v408 = vmax.f32 %v386, 0.0
      %v409 = vmax.f32 %v388, 0.0
      %v410 = vmax.f32 %v392, 0.0
      %v411 = vmax.f32 %v394, 0.0
      %v412 = vmax.f32 %v398, 0.0
      %v413 = vmax.f32 %v400, 0.0
      %v414 = vmax.f32 %v404, 0.0
      %v415 = vmax.f32 %v406, 0.0
      %416 = vset.pattern.permute.xlu0 1
      %417 = vperm.xlu0 %416, %v185
      %v418 = vpop.permute.xlu0 %417
      %420 = vset.pattern.permute.xlu0 1
      %421 = vperm.xlu0 %420, %v186
      %v422 = vpop.permute.xlu0 %421
      %424 = vset.pattern.permute.xlu0 1
      %425 = vperm.xlu0 %424, %v187
      %v426 = vpop.permute.xlu0 %425
      %428 = vset.pattern.permute.xlu0 1
      %429 = vperm.xlu0 %428, %v188
      %v430 = vpop.permute.xlu0 %429
      %vm432 = vcmask 261120
      %v434 = vsel %vm432, %v181, 0
      %v437 = vsel %vm432, %v182, 0
      %v440 = vsel %vm432, %v183, 0
      %v443 = vsel %vm432, %v184, 0
      %445 = vmatprep.subr.mxu0 0.0
      %446 = vmatpush1.msra.mxu0 0.0
      %447 = vmatprep.subr.mxu0 0.0
      %448 = vmatpush1.msra.mxu0 0.0
      %449 = vmatprep.subr.mxu0 0.0
      %450 = vmatpush1.msra.mxu0 0.0
      %451 = vmatprep.subr.mxu0 0.0
      %452 = vmatpush1.msra.mxu0 0.0
      %453 = vmatprep.subr.mxu0 0.0
      %454 = vmatpush1.msra.mxu0 0.0
      %455 = vmatprep.subr.mxu0 0.0
      %456 = vmatpush1.msra.mxu0 0.0
      %457 = vmatprep.subr.mxu0 0.0
      %458 = vmatpush1.msra.mxu0 0.0
      %459 = vmatprep.subr.mxu0 0.0
      %460 = vmatpush1.msra.mxu0 0.0
      %461 = vmatprep.subr.mxu0 0.0
      %462 = vmatpush1.msra.mxu0 0.0
      %463 = vmatprep.subr.mxu0 0.0
      %464 = vmatpush1.msra.mxu0 0.0
      %465 = vmatprep.subr.mxu0 0.0
      %466 = vmatpush1.msra.mxu0 0.0
      %467 = vmatprep.subr.mxu0 0.0
      %468 = vmatpush1.msra.mxu0 0.0
      %469 = vmatprep.subr.mxu0 %v415
      %470 = vmatpush1.msra.mxu0 %v414
      %471 = vmatprep.subr.mxu0 %v413
      %472 = vmatpush1.msra.mxu0 %v412
      %473 = vmatprep.subr.mxu0 %v411
      %474 = vmatpush1.msra.mxu0 %v410
      %475 = vmatprep.subr.mxu0 %v409
      %476 = vmatpush1.msra.mxu0 %v408
      %477 = vmatprep.subr.mxu0 0.0
      %478 = vmatpush2.msra.mxu0 0.0
      %479 = vmatprep.subr.mxu0 0.0
      %480 = vmatpush2.msra.mxu0 0.0
      %481 = vmatprep.subr.mxu0 0.0
      %482 = vmatpush2.msra.mxu0 0.0
      %483 = vmatprep.subr.mxu0 0.0
      %484 = vmatpush2.msra.mxu0 0.0
      %485 = vmatprep.subr.mxu0 0.0
      %486 = vmatpush2.msra.mxu0 0.0
      %487 = vmatprep.subr.mxu0 0.0
      %488 = vmatpush2.msra.mxu0 0.0
      %489 = vmatprep.subr.mxu0 0.0
      %490 = vmatpush2.msra.mxu0 0.0
      %491 = vmatprep.subr.mxu0 0.0
      %492 = vmatpush2.msra.mxu0 0.0
      %493 = vmatprep.subr.mxu0 0.0
      %494 = vmatpush2.msra.mxu0 0.0
      %495 = vmatprep.subr.mxu0 0.0
      %496 = vmatpush2.msra.mxu0 0.0
      %497 = vmatprep.subr.mxu0 0.0
      %498 = vmatpush2.msra.mxu0 0.0
      %499 = vmatprep.subr.mxu0 0.0
      %500 = vmatpush2.msra.mxu0 0.0
      %501 = vmatprep.subr.mxu0 0.0
      %502 = vmatpush2.msra.mxu0 0.0
      %503 = vmatprep.subr.mxu0 0.0
      %504 = vmatpush2.msra.mxu0 0.0
      %505 = vmatprep.subr.mxu0 0.0
      %506 = vmatpush2.msra.mxu0 0.0
      %507 = vmatprep.subr.mxu0 0.0
      %508 = vmatpush2.msra.mxu0 0.0
      %509 = vmatprep.mubr.f32.mxu0 0.0
      %510 = vmatmul.mubr.f32.gmra.mxu0 %v434
      %v511 = vpop.f32.mrf.mxu0
      %v512 = vadd.f32 %v418, %v511
      %v513 = vpop.f32.mrf.mxu0
      %v514 = vadd.f32 %v418, %v513
      %515 = vmatprep.mubr.f32.mxu0 0.0
      %516 = vmatmul.mubr.f32.gmra.mxu0 %v437
      %v517 = vpop.f32.mrf.mxu0
      %v518 = vadd.f32 %v422, %v517
      %v519 = vpop.f32.mrf.mxu0
      %v520 = vadd.f32 %v422, %v519
      %521 = vmatprep.mubr.f32.mxu0 0.0
      %522 = vmatmul.mubr.f32.gmra.mxu0 %v440
      %v523 = vpop.f32.mrf.mxu0
      %v524 = vadd.f32 %v426, %v523
      %v525 = vpop.f32.mrf.mxu0
      %v526 = vadd.f32 %v426, %v525
      %527 = vmatprep.mubr.f32.mxu0 0.0
      %528 = vmatmul.mubr.f32.gmra.mxu0 %v443
      %v529 = vpop.f32.mrf.mxu0
      %v530 = vadd.f32 %v430, %v529
      %v531 = vpop.f32.mrf.mxu0
      %v532 = vadd.f32 %v430, %v531
      %533 = vdwg.mxu0
      %v534 = vmax.f32 %v512, 0.0
      %v535 = vmax.f32 %v514, 0.0
      %v536 = vmax.f32 %v518, 0.0
      %v537 = vmax.f32 %v520, 0.0
      %v538 = vmax.f32 %v524, 0.0
      %v539 = vmax.f32 %v526, 0.0
      %v540 = vmax.f32 %v530, 0.0
      %v541 = vmax.f32 %v532, 0.0
      %542 = vset.pattern.permute.xlu0 2
      %543 = vperm.xlu0 %542, %v185
      %v544 = vpop.permute.xlu0 %543
      %546 = vset.pattern.permute.xlu0 2
      %547 = vperm.xlu0 %546, %v186
      %v548 = vpop.permute.xlu0 %547
      %550 = vset.pattern.permute.xlu0 2
      %551 = vperm.xlu0 %550, %v187
      %v552 = vpop.permute.xlu0 %551
      %554 = vset.pattern.permute.xlu0 2
      %555 = vperm.xlu0 %554, %v188
      %v556 = vpop.permute.xlu0 %555
      %v558 = vmul.f32 %v534, %v544
      %v559 = vmul.f32 %v535, %v544
      %v560 = vmul.f32 %v536, %v548
      %v561 = vmul.f32 %v537, %v548
      %v562 = vmul.f32 %v538, %v552
      %v563 = vmul.f32 %v539, %v552
      %v564 = vmul.f32 %v540, %v556
      %v565 = vmul.f32 %v541, %v556
      %v566 = vadd.f32 %v558, %v560
      %v567 = vadd.f32 %v566, %v562
      %v568 = vadd.f32 %v567, %v564
      %v569 = vrot.slane %v568, 4
      %v570 = vadd.f32 %v568, %v569
      %v571 = vrot.slane %v570, 2
      %v572 = vadd.f32 %v570, %v571
      %v573 = vrot.slane %v572, 1
      %v574 = vadd.f32 %v572, %v573
      %v575 = vadd.f32 %v559, %v561
      %v576 = vadd.f32 %v575, %v563
      %v577 = vadd.f32 %v576, %v565
      %v578 = vrot.slane %v577, 4
      %v579 = vadd.f32 %v577, %v578
      %v580 = vrot.slane %v579, 2
      %v581 = vadd.f32 %v579, %v580
      %v582 = vrot.slane %v581, 1
      %v583 = vadd.f32 %v581, %v582
      %585 = vset.pattern.permute.xlu0 3
      %586 = vperm.xlu0 %585, %v189
      %v587 = vpop.permute.xlu0 %586
      %v589 = vadd.f32 %v574, %v587
      %v590 = vadd.f32 %v583, %v587
      %v593 = vcombine.low %v589, %v590
      %v595 = vunpack.c.l.s4 1966171168
      %v596 = vunpack.c.0.s8 %v595
      %v597 = vlaneseq
      %v598 = vshrl.u32 %v597, 7
      %v599 = vsub.s32 %v596, %v598
      %v600 = vrot.slane %v593, %v599
      %v602 = vunpack.c.l.s4 1966171168
      %v603 = vunpack.c.0.s8 %v602
      %v604 = vlaneseq
      %v605 = vshrl.u32 %v604, 7
      %v606 = vsub.s32 %v603, %v605
      %v607 = vrot.slane %v600, %v606
      %v609 = vlaneseq
      %vm610 = vcmp.ge.s32.totalorder %v609, 0
      %vm611 = vcmp.lt.s32.totalorder %v609, 256
      %vm612 = vmand %vm610, %vm611
      %613 = vst.msk [vmem:[%s143] sm:$0x3] %vm612, %v607
      %s614 = smul.u32 2, %s13
      %p615 = scmp.lt.s32.totalorder %s614, 3
      %s616 = scalar_select %p615, %s614, 3
      %s617 = scalar_lea.vmem %s2, %s616
      // Predicated region
      $region29: #{critic_forward.1} parent=27 // pred_check
        %p618 = pneg %p78
      $region30: #{critic_forward.1} parent=27 // pred_check_branch
        %620 = sbr.rel (%p618) target = $region32
      $region31: #{critic_forward.1} parent=27 // pred_region
        %s621 = smul.u32 2, %s13
      $region32: #{critic_forward.1} parent=27 // pred_fallthru
        _
    $region28: #{critic_forward.1} parent=5 // pred_fallthru
      _
    %p622 = scmp.le.s32.totalorder 2, %s8
    // Predicated region
    $region33: #{critic_forward.1} parent=5 // pred_check
      %p623 = pneg %p622
    $region34: #{critic_forward.1} parent=5 // pred_check_branch
      %625 = sbr.rel (%p623) target = $region36
    $region35: #{critic_forward.1} parent=5 // pred_region
      %s626 = ssub.s32 %s8, 2
      // Predicated region
      $region37: #{critic_forward.1} parent=35 // pred_check
        %p627 = pneg %p84
      $region38: #{critic_forward.1} parent=35 // pred_check_branch
        %629 = sbr.rel (%p627) target = $region40
      $region39: #{critic_forward.1} parent=35 // pred_region
        %s630 = smul.u32 2, %s14
        %p631 = scmp.lt.s32.totalorder %s630, 3
        %s632 = scalar_select %p631, %s630, 3
        %s633 = scalar_lea.vmem %s2, %s632
      $region40: #{critic_forward.1} parent=35 // pred_fallthru
        _
    $region36: #{critic_forward.1} parent=5 // pred_fallthru
      _
  $region6: #{critic_forward.1} parent=0 // loop_footer
    %s12 = sadd.s32 1, %s8
  $region7: #{critic_forward.1} parent=0 // loop_footer_branch
    %7 = sbr.rel target = $region3
  $region8: #{critic_forward.1} parent=0 // loop_exit
    _

</llo_original>
